<compile_context>
chip_gen: v7x
topology: tpu7x:2x2x1
jax: 0.10.0
libtpu: 0.0.40
codegen_flags: <defaults>
</compile_context>

<pallas_src>
import functools

import jax
import jax.numpy as jnp
from jax.experimental import pallas as pl
from jax.experimental.pallas import tpu as pltpu


def _round_up(x, m):
    return ((x + m - 1) // m) * m


def actor_kernel(x_ref, w1_ref, b1_ref, w2_ref, b2_ref, w3_ref, b3_ref, o_ref):
    # fc1/fc2 on the MXU with bf16 inputs + f32 accumulation; fc3 fully f32
    # (tiny). Bias-add / relu stay f32 on the VPU, tanh on the EUP.
    x = x_ref[...].astype(jnp.bfloat16)                          # (TB, S)
    h1 = jnp.dot(x, w1_ref[...], preferred_element_type=jnp.float32) + b1_ref[...]
    h1 = jnp.maximum(h1, 0.0)                                    # f32 (TB, 256)
    h2 = jnp.dot(h1.astype(jnp.bfloat16), w2_ref[...],
                 preferred_element_type=jnp.float32) + b2_ref[...]
    h2 = jnp.maximum(h2, 0.0)                                    # f32 (TB, 128)
    h3 = jnp.dot(h2, w3_ref[...],
                 preferred_element_type=jnp.float32) + b3_ref[...]
    o_ref[...] = jnp.tanh(h3).astype(o_ref.dtype)                # (TB, action_size)


def prepare_actor_params(params):
    """One-time prep (call outside the hot path): bf16 weights for fc1/fc2,
    f32 biases, fc3 kept in f32 for numerical parity."""
    w1, b1, w2, b2, w3, b3 = params
    return (
        w1.astype(jnp.bfloat16),
        b1.astype(jnp.float32).reshape(1, -1),
        w2.astype(jnp.bfloat16),
        b2.astype(jnp.float32).reshape(1, -1),
        w3.astype(jnp.float32),
        b3.astype(jnp.float32).reshape(1, -1),
    )


@functools.partial(jax.jit, static_argnames=("block_b",))
def actor_forward(x, prepared_params, *, block_b=256):
    """Fused actor MLP forward: x (B, state_size) f32 -> actions (B, action_size) f32."""
    w1, b1, w2, b2, w3, b3 = prepared_params
    B, S = x.shape
    F1 = w1.shape[1]
    F2 = w2.shape[1]
    A = w3.shape[1]

    # Batch tile: sublane-aligned, capped so there are >=2 grid steps whenever
    # the batch allows (megacore sharding + pipeline double-buffering).
    TB = max(8, min(block_b, _round_up(-(-B // 2), 8)))
    grid = (pl.cdiv(B, TB),)

    resident = lambda shape: pl.BlockSpec(shape, lambda i: (0, 0))  # VMEM-pinned

    out = pl.pallas_call(
        actor_kernel,
        out_shape=jax.ShapeDtypeStruct((B, A), jnp.float32),
        grid=grid,
        in_specs=[
            pl.BlockSpec((TB, S), lambda i: (i, 0)),   # activations: streamed
            resident((S, F1)),                         # w1 (bf16)
            resident((1, F1)),                         # b1 (f32)
            resident((F1, F2)),                        # w2 (bf16)
            resident((1, F2)),                         # b2 (f32)
            resident((F2, A)),                         # w3 (f32)
            resident((1, A)),                          # b3 (f32)
        ],
        out_specs=pl.BlockSpec((TB, A), lambda i: (i, 0)),
        compiler_params=pltpu.CompilerParams(
            dimension_semantics=("parallel",)),        # v7x: shard batch across 2 TCs
    )(x, w1, b1, w2, b2, w3, b3)

    return out


def init_actor_params(key, state_size, action_size, fc1_units=256, fc2_units=128):
    """Init mirroring the PyTorch module's reset_parameters():
    hidden_init(fc1) = U(+-1/sqrt(fc1.weight.size(0)=fc1_units)) is used for BOTH
    fc1 and fc2 weights (as written in the reference code); fc3 ~ U(-3e-3, 3e-3).
    Biases use nn.Linear's default U(+-1/sqrt(fan_in))."""
    k = jax.random.split(key, 6)
    lim12 = 1.0 / jnp.sqrt(jnp.float32(fc1_units))
    w1 = jax.random.uniform(k[0], (state_size, fc1_units), jnp.float32, -lim12, lim12)
    w2 = jax.random.uniform(k[1], (fc1_units, fc2_units), jnp.float32, -lim12, lim12)
    w3 = jax.random.uniform(k[2], (fc2_units, action_size), jnp.float32, -3e-3, 3e-3)
    b1 = jax.random.uniform(k[3], (1, fc1_units), jnp.float32,
                            -1.0 / jnp.sqrt(jnp.float32(state_size)),
                            1.0 / jnp.sqrt(jnp.float32(state_size)))
    b2 = jax.random.uniform(k[4], (1, fc2_units), jnp.float32,
                            -1.0 / jnp.sqrt(jnp.float32(fc1_units)),
                            1.0 / jnp.sqrt(jnp.float32(fc1_units)))
    b3 = jax.random.uniform(k[5], (1, action_size), jnp.float32,
                            -1.0 / jnp.sqrt(jnp.float32(fc2_units)),
                            1.0 / jnp.sqrt(jnp.float32(fc2_units)))
    return (w1, b1, w2, b2, w3, b3)


def _reference(x, params):
    w1, b1, w2, b2, w3, b3 = params
    h1 = jnp.maximum(x @ w1 + b1, 0.0)
    h2 = jnp.maximum(h1 @ w2 + b2, 0.0)
    return jnp.tanh(h2 @ w3 + b3)


if __name__ == "__main__":
    # Tennis env: state_size=24, action_size=2.
    state_size, action_size = 24, 2

    key = jax.random.PRNGKey(0)
    k_params, k_s1, k_s2 = jax.random.split(key, 3)
    params = init_actor_params(k_params, state_size, action_size)
    prepared = prepare_actor_params(params)   # one-time prep, off the hot path

    # Small batch (single grid step).
    batch = 8
    state = jax.random.normal(k_s1, (batch, state_size), jnp.float32)
    out = jax.block_until_ready(actor_forward(state, prepared))
    ref = _reference(state, params)
    assert out.shape == (batch, action_size)
    # bf16 fc1/fc2 matmul inputs with f32 accumulation -> loosened tolerance.
    assert jnp.allclose(out, ref, atol=2e-2, rtol=2e-2), float(jnp.max(jnp.abs(out - ref)))

    # Larger, non-multiple batch: grid > 1, masked edge block (260 = 2*128 + 4).
    batch2 = 260
    state2 = jax.random.normal(k_s2, (batch2, state_size), jnp.float32)
    out2 = jax.block_until_ready(actor_forward(state2, prepared, block_b=128))
    ref2 = _reference(state2, params)
    assert out2.shape == (batch2, action_size)
    assert jnp.allclose(out2, ref2, atol=2e-2, rtol=2e-2), float(jnp.max(jnp.abs(out2 - ref2)))

    print("KERNEL_OK")
</pallas_src>

<mosaic_0001>
module attributes {stable_mosaic.version = 11 : i64} {
  func.func @actor_kernel(%arg0: i32, %arg1: memref<8x24xf32, #tpu.memory_space<vmem>>, %arg2: memref<24x256xbf16, #tpu.memory_space<vmem>>, %arg3: memref<1x256xf32, #tpu.memory_space<vmem>>, %arg4: memref<256x128xbf16, #tpu.memory_space<vmem>>, %arg5: memref<1x128xf32, #tpu.memory_space<vmem>>, %arg6: memref<128x2xf32, #tpu.memory_space<vmem>>, %arg7: memref<1x2xf32, #tpu.memory_space<vmem>>, %arg8: memref<8x2xf32, #tpu.memory_space<vmem>>) attributes {dimension_semantics = [#tpu.dimension_semantics<parallel>], iteration_bounds = array<i64: 1>, scalar_prefetch = 0 : i64, scratch_operands = 0 : i64, tpu.core_type = #tpu.core_type<tc>, window_params = [{transform_indices = @transform_0, window_bounds = array<i64: 8, 24>}, {pipeline_mode = #tpu.pipeline_mode<synchronous>, transform_indices = @transform_1, window_bounds = array<i64: 24, 256>}, {pipeline_mode = #tpu.pipeline_mode<synchronous>, transform_indices = @transform_2, window_bounds = array<i64: 1, 256>}, {pipeline_mode = #tpu.pipeline_mode<synchronous>, transform_indices = @transform_3, window_bounds = array<i64: 256, 128>}, {pipeline_mode = #tpu.pipeline_mode<synchronous>, transform_indices = @transform_4, window_bounds = array<i64: 1, 128>}, {pipeline_mode = #tpu.pipeline_mode<synchronous>, transform_indices = @transform_5, window_bounds = array<i64: 128, 2>}, {pipeline_mode = #tpu.pipeline_mode<synchronous>, transform_indices = @transform_6, window_bounds = array<i64: 1, 2>}, {transform_indices = @transform_7, window_bounds = array<i64: 8, 2>}]} {
    %c0 = arith.constant 0 : index
    %c0_0 = arith.constant 0 : index
    %0 = vector.load %arg1[%c0, %c0_0] : memref<8x24xf32, #tpu.memory_space<vmem>>, vector<8x24xf32>
    %1 = arith.truncf %0 : vector<8x24xf32> to vector<8x24xbf16>
    %c0_1 = arith.constant 0 : index
    %c0_2 = arith.constant 0 : index
    %2 = vector.load %arg2[%c0_1, %c0_2] : memref<24x256xbf16, #tpu.memory_space<vmem>>, vector<24x256xbf16>
    %cst = arith.constant dense<0.000000e+00> : vector<8x256xf32>
    %3 = tpu.matmul %1, %2, %cst {dimension_numbers = #tpu.dot_dimension_numbers<[1], [0], [0], [1], [0, 0, 1, 1], [], []>} : vector<8x24xbf16>, vector<24x256xbf16>, vector<8x256xf32> -> vector<8x256xf32>
    %c0_3 = arith.constant 0 : index
    %c0_4 = arith.constant 0 : index
    %4 = vector.load %arg3[%c0_3, %c0_4] : memref<1x256xf32, #tpu.memory_space<vmem>>, vector<1x256xf32>
    %5 = vector.broadcast %4 : vector<1x256xf32> to vector<8x256xf32>
    %6 = arith.addf %3, %5 : vector<8x256xf32>
    %cst_5 = arith.constant 0.000000e+00 : f32
    %7 = vector.broadcast %cst_5 : f32 to vector<8x256xf32>
    %8 = arith.maximumf %6, %7 : vector<8x256xf32>
    %9 = arith.truncf %8 : vector<8x256xf32> to vector<8x256xbf16>
    %c0_6 = arith.constant 0 : index
    %c0_7 = arith.constant 0 : index
    %10 = vector.load %arg4[%c0_6, %c0_7] : memref<256x128xbf16, #tpu.memory_space<vmem>>, vector<256x128xbf16>
    %cst_8 = arith.constant dense<0.000000e+00> : vector<8x128xf32>
    %11 = tpu.matmul %9, %10, %cst_8 {dimension_numbers = #tpu.dot_dimension_numbers<[1], [0], [0], [1], [0, 0, 1, 1], [], []>} : vector<8x256xbf16>, vector<256x128xbf16>, vector<8x128xf32> -> vector<8x128xf32>
    %c0_9 = arith.constant 0 : index
    %c0_10 = arith.constant 0 : index
    %12 = vector.load %arg5[%c0_9, %c0_10] : memref<1x128xf32, #tpu.memory_space<vmem>>, vector<1x128xf32>
    %13 = vector.broadcast %12 : vector<1x128xf32> to vector<8x128xf32>
    %14 = arith.addf %11, %13 : vector<8x128xf32>
    %cst_11 = arith.constant 0.000000e+00 : f32
    %15 = vector.broadcast %cst_11 : f32 to vector<8x128xf32>
    %16 = arith.maximumf %14, %15 : vector<8x128xf32>
    %c0_12 = arith.constant 0 : index
    %c0_13 = arith.constant 0 : index
    %17 = vector.load %arg6[%c0_12, %c0_13] : memref<128x2xf32, #tpu.memory_space<vmem>>, vector<128x2xf32>
    %cst_14 = arith.constant dense<0.000000e+00> : vector<8x2xf32>
    %18 = tpu.matmul %16, %17, %cst_14 {dimension_numbers = #tpu.dot_dimension_numbers<[1], [0], [0], [1], [0, 0, 1, 1], [], []>} : vector<8x128xf32>, vector<128x2xf32>, vector<8x2xf32> -> vector<8x2xf32>
    %c0_15 = arith.constant 0 : index
    %c0_16 = arith.constant 0 : index
    %19 = vector.load %arg7[%c0_15, %c0_16] : memref<1x2xf32, #tpu.memory_space<vmem>>, vector<1x2xf32>
    %20 = vector.broadcast %19 : vector<1x2xf32> to vector<8x2xf32>
    %21 = arith.addf %18, %20 : vector<8x2xf32>
    %22 = math.tanh %21 : vector<8x2xf32>
    %c0_17 = arith.constant 0 : index
    %c0_18 = arith.constant 0 : index
    %23 = vector.load %arg8[%c0_17, %c0_18] : memref<8x2xf32, #tpu.memory_space<vmem>>, vector<8x2xf32>
    tpu.vector_store %arg8[%c0_17, %c0_18], %22 {strides = array<i32>} : memref<8x2xf32, #tpu.memory_space<vmem>>, vector<8x2xf32>,
    return
  }
  func.func @transform_0(%arg0: i32) -> (i32, i32) {
    %c0_i32 = arith.constant 0 : i32
    %c0_i32_0 = arith.constant 0 : i32
    return %arg0, %c0_i32 : i32, i32
  }
  func.func @transform_1(%arg0: i32) -> (i32, i32) {
    %c0_i32 = arith.constant 0 : i32
    %c0_i32_0 = arith.constant 0 : i32
    %c0_i32_1 = arith.constant 0 : i32
    return %c0_i32, %c0_i32_0 : i32, i32
  }
  func.func @transform_2(%arg0: i32) -> (i32, i32) {
    %c0_i32 = arith.constant 0 : i32
    %c0_i32_0 = arith.constant 0 : i32
    %c0_i32_1 = arith.constant 0 : i32
    return %c0_i32, %c0_i32_0 : i32, i32
  }
  func.func @transform_3(%arg0: i32) -> (i32, i32) {
    %c0_i32 = arith.constant 0 : i32
    %c0_i32_0 = arith.constant 0 : i32
    %c0_i32_1 = arith.constant 0 : i32
    return %c0_i32, %c0_i32_0 : i32, i32
  }
  func.func @transform_4(%arg0: i32) -> (i32, i32) {
    %c0_i32 = arith.constant 0 : i32
    %c0_i32_0 = arith.constant 0 : i32
    %c0_i32_1 = arith.constant 0 : i32
    return %c0_i32, %c0_i32_0 : i32, i32
  }
  func.func @transform_5(%arg0: i32) -> (i32, i32) {
    %c0_i32 = arith.constant 0 : i32
    %c0_i32_0 = arith.constant 0 : i32
    %c0_i32_1 = arith.constant 0 : i32
    return %c0_i32, %c0_i32_0 : i32, i32
  }
  func.func @transform_6(%arg0: i32) -> (i32, i32) {
    %c0_i32 = arith.constant 0 : i32
    %c0_i32_0 = arith.constant 0 : i32
    %c0_i32_1 = arith.constant 0 : i32
    return %c0_i32, %c0_i32_0 : i32, i32
  }
  func.func @transform_7(%arg0: i32) -> (i32, i32) {
    %c0_i32 = arith.constant 0 : i32
    %c0_i32_0 = arith.constant 0 : i32
    return %arg0, %c0_i32 : i32, i32
  }
}

</mosaic_0001>

<llo_original>
// kernel: actor_forward.1
$region0: #{actor_forward.1}
  #allocation0 [shape = 'u32[]', space=smem, size = 0x4, offset = 0x4, fixed_abs, tag = 'smem constant byte address 0x4 - core index']
  #allocation1 [shape = 'u32[144,128]{1,0:T(1,128)}', space=vmem, size = 0x12000, scoped, tag = 'internal scratch']
  %s0 = inlined_call_operand.vmem [shape: f32[8,24], index: 0, kind: input, shape index: {}]
  %s1 = inlined_call_operand.hbm [shape: bf16[24,256], index: 1, kind: input, shape index: {}]
  %s2 = inlined_call_operand.vmem [shape: f32[1,256], index: 2, kind: input, shape index: {}]
  %s3 = inlined_call_operand.vmem [shape: bf16[256,128], index: 3, kind: input, shape index: {}]
  %s4 = inlined_call_operand.vmem [shape: f32[1,128], index: 4, kind: input, shape index: {}]
  %s5 = inlined_call_operand.vmem [shape: f32[128,2], index: 5, kind: input, shape index: {}]
  %s6 = inlined_call_operand.vmem [shape: f32[1,2], index: 6, kind: input, shape index: {}]
  %s7 = inlined_call_operand.vmem [shape: f32[8,2], index: 7, kind: output, shape index: {}]
  %s8 = sld [smem:[#allocation0]]
  $region42: #{actor_forward.1} parent=0
    _
  %s10 = ssub.s32 1, %s8
  %s11 = scalar_select 0, %s10, %s8
  $region1: #{actor_forward.1} parent=0
    #allocation2 [shape = 'u8[12288]{0}', space=vmem, size = 0x3000, scoped, tag = 'input window, operand 1, single buffered']
    #allocation3 [shape = 's32[1]{0}', space=sflag, size = 0x4, scoped, tag = 'scoped memory for actor_forward.1']
    %12 = vsyncpa [#allocation3], 0
    // Predicated region
    $region2: #{actor_forward.1} parent=1 // pred_check
      _
    $region3: #{actor_forward.1} parent=1 // pred_check_branch
      %14 = sbr.rel (0) target = $region5
    $region4: #{actor_forward.1} parent=1 // pred_region
      _
    $region5: #{actor_forward.1} parent=1 // pred_fallthru
      _
    // Predicated region
    $region6: #{actor_forward.1} parent=1 // pred_check
      _
    $region7: #{actor_forward.1} parent=1 // pred_check_branch
      %16 = sbr.rel (0) target = $region9
    $region8: #{actor_forward.1} parent=1 // pred_region
      %s18 = ssub.s32 384, 384
      %19 = vsyncadd [#allocation3], %s18
      %s20 = sshll.u32 [#allocation2], 4
      %s21 = int_to_ptr.vmem [resolvable:$true] %s20
      %26 = dma.hbm_to_vmem [thread:$0]  %s1, 384, %s21, [#allocation3], 128, 128, 8
    $region9: #{actor_forward.1} parent=1 // pred_fallthru
      _
    // Predicated region
    $region10: #{actor_forward.1} parent=1 // pred_check
      _
    $region11: #{actor_forward.1} parent=1 // pred_check_branch
      %28 = sbr.rel (0) target = $region13
    $region12: #{actor_forward.1} parent=1 // pred_region
      _
    $region13: #{actor_forward.1} parent=1 // pred_fallthru
      _
    // Predicated region
    $region14: #{actor_forward.1} parent=1 // pred_check
      _
    $region15: #{actor_forward.1} parent=1 // pred_check_branch
      %30 = sbr.rel (0) target = $region17
    $region16: #{actor_forward.1} parent=1 // pred_region
      _
    $region17: #{actor_forward.1} parent=1 // pred_fallthru
      _
    // Predicated region
    $region18: #{actor_forward.1} parent=1 // pred_check
      _
    $region19: #{actor_forward.1} parent=1 // pred_check_branch
      %32 = sbr.rel (0) target = $region21
    $region20: #{actor_forward.1} parent=1 // pred_region
      _
    $region21: #{actor_forward.1} parent=1 // pred_fallthru
      _
    // Predicated region
    $region22: #{actor_forward.1} parent=1 // pred_check
      _
    $region23: #{actor_forward.1} parent=1 // pred_check_branch
      %34 = sbr.rel (0) target = $region25
    $region24: #{actor_forward.1} parent=1 // pred_region
      _
    $region25: #{actor_forward.1} parent=1 // pred_fallthru
      _
    // Predicated region
    $region26: #{actor_forward.1} parent=1 // pred_check
      _
    $region27: #{actor_forward.1} parent=1 // pred_check_branch
      %36 = sbr.rel (0) target = $region29
    $region28: #{actor_forward.1} parent=1 // pred_region
      _
    $region29: #{actor_forward.1} parent=1 // pred_fallthru
      _
    // Predicated region
    $region30: #{actor_forward.1} parent=1 // pred_check
      _
    $region31: #{actor_forward.1} parent=1 // pred_check_branch
      %38 = sbr.rel (0) target = $region33
    $region32: #{actor_forward.1} parent=1 // pred_region
      %39 = dma.done [#allocation3], 384
    $region33: #{actor_forward.1} parent=1 // pred_fallthru
      _
    %v41 = vld [vmem:[%s0] sm:$0xff]
    %v42 = vpack.c.bf16 %v41, %v41
    %v43 = vld [vmem:[#allocation2] sm:$0xff]
    %v44 = vld [vmem:[#allocation2 + $0x8] sm:$0xff]
    %v45 = vld [vmem:[#allocation2 + $0x10] sm:$0xff]
    %v46 = vld [vmem:[%s2] sm:$0x3]
    %v48 = vlaneseq
    %v49 = vshrl.u32 %v48, 7
    %v50 = vsub.s32 0, %v49
    %v51 = vrot.slane %v46, %v50
    %v52 = vlaneseq
    %v53 = vshrl.u32 %v52, 7
    %v54 = vsub.s32 1, %v53
    %v55 = vrot.slane %v46, %v54
    %v61 = vunpack.c.l.b16 %v43
    %v62 = vunpack.c.h.b16 %v43
    %v63 = vunpack.c.l.b16 %v44
    %v64 = vunpack.c.h.b16 %v44
    %v65 = vunpack.c.l.b16 %v45
    %v66 = vunpack.c.h.b16 %v45
    %v67 = vpack.c.b16 %v63, %v61
    %v68 = vpack.c.b16 %v64, %v62
    %v69 = vpack.c.b16 %v65, %v65
    %v70 = vpack.c.b16 %v66, %v66
    %vm73 = vcmask 195584
    %v75 = vsel %vm73, %v42, 0
    %vm77 = vcmask 1043456
    %v79 = vsel %vm77, %v69, 0
    %v82 = vsel %vm77, %v70, 0
    %84 = vmatprep.subr.bf16.mxu0 %v68
    %85 = vmatpush1.bf16.msra.mxu0 %v67
    %86 = vmatprep.subr.bf16.mxu0 %v82
    %87 = vmatpush1.bf16.msra.mxu0 %v79
    %88 = vmatprep.subr.bf16.mxu0 0
    %89 = vmatpush1.bf16.msra.mxu0 0
    %90 = vmatprep.subr.bf16.mxu0 0
    %91 = vmatpush1.bf16.msra.mxu0 0
    %92 = vmatprep.subr.bf16.mxu0 0
    %93 = vmatpush1.bf16.msra.mxu0 0
    %94 = vmatprep.subr.bf16.mxu0 0
    %95 = vmatpush1.bf16.msra.mxu0 0
    %96 = vmatprep.subr.bf16.mxu0 0
    %97 = vmatpush1.bf16.msra.mxu0 0
    %98 = vmatprep.subr.bf16.mxu0 0
    %99 = vmatpush1.bf16.msra.mxu0 0
    %100 = vmatprep.subr.bf16.mxu0 0
    %101 = vmatpush1.bf16.msra.mxu0 0
    %102 = vmatprep.subr.bf16.mxu0 0
    %103 = vmatpush1.bf16.msra.mxu0 0
    %104 = vmatprep.subr.bf16.mxu0 0
    %105 = vmatpush1.bf16.msra.mxu0 0
    %106 = vmatprep.subr.bf16.mxu0 0
    %107 = vmatpush1.bf16.msra.mxu0 0
    %108 = vmatprep.subr.bf16.mxu0 0
    %109 = vmatpush1.bf16.msra.mxu0 0
    %110 = vmatprep.subr.bf16.mxu0 0
    %111 = vmatpush1.bf16.msra.mxu0 0
    %112 = vmatprep.subr.bf16.mxu0 0
    %113 = vmatpush1.bf16.msra.mxu0 0
    %114 = vmatprep.subr.bf16.mxu0 0
    %115 = vmatpush1.bf16.msra.mxu0 0
    %116 = vmatprep.mubr.bf16.mxu0 0
    %117 = vmatmul.mubr.bf16.gmra.mrb[0].mxu0 %v75
    %v118 = vpop.f32.mrb[0].mxu0
    %v119 = vadd.f32 %v51, %v118
    %v120 = vpop.f32.mrb[0].mxu0
    %v121 = vadd.f32 %v55, %v120
    %v122 = vpop.f32.mrb[0].mxu0
    %v123 = vpop.f32.mrb[0].mxu0
    %124 = vdwg.mxu0
    %v125 = vmax.f32 %v119, 0.0
    %v126 = vmax.f32 %v121, 0.0
    %v127 = vpack.c.bf16 %v125, %v125
    %v128 = vpack.c.bf16 %v126, %v126
    %v129 = vld [vmem:[%s3] sm:$0xf]
    %v130 = vld [vmem:[%s3 + $0x4] sm:$0xf]
    %v131 = vld [vmem:[%s3 + $0x8] sm:$0xf]
    %v132 = vld [vmem:[%s3 + $0xc] sm:$0xf]
    %v133 = vld [vmem:[%s3 + $0x10] sm:$0xf]
    %v134 = vld [vmem:[%s3 + $0x14] sm:$0xf]
    %v135 = vld [vmem:[%s3 + $0x18] sm:$0xf]
    %v136 = vld [vmem:[%s3 + $0x1c] sm:$0xf]
    %v137 = vld [vmem:[%s3 + $0x20] sm:$0xf]
    %v138 = vld [vmem:[%s3 + $0x24] sm:$0xf]
    %v139 = vld [vmem:[%s3 + $0x28] sm:$0xf]
    %v140 = vld [vmem:[%s3 + $0x2c] sm:$0xf]
    %v141 = vld [vmem:[%s3 + $0x30] sm:$0xf]
    %v142 = vld [vmem:[%s3 + $0x34] sm:$0xf]
    %v143 = vld [vmem:[%s3 + $0x38] sm:$0xf]
    %v144 = vld [vmem:[%s3 + $0x3c] sm:$0xf]
    %v145 = vld [vmem:[%s3 + $0x40] sm:$0xf]
    %v146 = vld [vmem:[%s3 + $0x44] sm:$0xf]
    %v147 = vld [vmem:[%s3 + $0x48] sm:$0xf]
    %v148 = vld [vmem:[%s3 + $0x4c] sm:$0xf]
    %v149 = vld [vmem:[%s3 + $0x50] sm:$0xf]
    %v150 = vld [vmem:[%s3 + $0x54] sm:$0xf]
    %v151 = vld [vmem:[%s3 + $0x58] sm:$0xf]
    %v152 = vld [vmem:[%s3 + $0x5c] sm:$0xf]
    %v153 = vld [vmem:[%s3 + $0x60] sm:$0xf]
    %v154 = vld [vmem:[%s3 + $0x64] sm:$0xf]
    %v155 = vld [vmem:[%s3 + $0x68] sm:$0xf]
    %v156 = vld [vmem:[%s3 + $0x6c] sm:$0xf]
    %v157 = vld [vmem:[%s3 + $0x70] sm:$0xf]
    %v158 = vld [vmem:[%s3 + $0x74] sm:$0xf]
    %v159 = vld [vmem:[%s3 + $0x78] sm:$0xf]
    %v160 = vld [vmem:[%s3 + $0x7c] sm:$0xf]
    %v161 = vld [vmem:[%s4] sm:$0x1]
    %v163 = vlaneseq
    %v164 = vshrl.u32 %v163, 7
    %v165 = vsub.s32 0, %v164
    %v166 = vrot.slane %v161, %v165
    %v200 = vunpack.c.l.b16 %v129
    %v201 = vunpack.c.l.b16 %v130
    %v202 = vunpack.c.l.b16 %v131
    %v203 = vunpack.c.l.b16 %v132
    %v204 = vunpack.c.l.b16 %v133
    %v205 = vunpack.c.l.b16 %v134
    %v206 = vunpack.c.l.b16 %v135
    %v207 = vunpack.c.l.b16 %v136
    %v208 = vunpack.c.l.b16 %v137
    %v209 = vunpack.c.l.b16 %v138
    %v210 = vunpack.c.l.b16 %v139
    %v211 = vunpack.c.l.b16 %v140
    %v212 = vunpack.c.l.b16 %v141
    %v213 = vunpack.c.l.b16 %v142
    %v214 = vunpack.c.l.b16 %v143
    %v215 = vunpack.c.l.b16 %v144
    %v216 = vunpack.c.l.b16 %v145
    %v217 = vunpack.c.l.b16 %v146
    %v218 = vunpack.c.l.b16 %v147
    %v219 = vunpack.c.l.b16 %v148
    %v220 = vunpack.c.l.b16 %v149
    %v221 = vunpack.c.l.b16 %v150
    %v222 = vunpack.c.l.b16 %v151
    %v223 = vunpack.c.l.b16 %v152
    %v224 = vunpack.c.l.b16 %v153
    %v225 = vunpack.c.l.b16 %v154
    %v226 = vunpack.c.l.b16 %v155
    %v227 = vunpack.c.l.b16 %v156
    %v228 = vunpack.c.l.b16 %v157
    %v229 = vunpack.c.l.b16 %v158
    %v230 = vunpack.c.l.b16 %v159
    %v231 = vunpack.c.l.b16 %v160
    %v232 = vpack.c.b16 %v201, %v200
    %v233 = vpack.c.b16 %v203, %v202
    %v234 = vpack.c.b16 %v205, %v204
    %v235 = vpack.c.b16 %v207, %v206
    %v236 = vpack.c.b16 %v209, %v208
    %v237 = vpack.c.b16 %v211, %v210
    %v238 = vpack.c.b16 %v213, %v212
    %v239 = vpack.c.b16 %v215, %v214
    %v240 = vpack.c.b16 %v217, %v216
    %v241 = vpack.c.b16 %v219, %v218
    %v242 = vpack.c.b16 %v221, %v220
    %v243 = vpack.c.b16 %v223, %v222
    %v244 = vpack.c.b16 %v225, %v224
    %v245 = vpack.c.b16 %v227, %v226
    %v246 = vpack.c.b16 %v229, %v228
    %v247 = vpack.c.b16 %v231, %v230
    %264 = vmatprep.subr.bf16.mxu0 0
    %265 = vmatpush1.bf16.msra.mxu0 %v232
    %266 = vmatprep.subr.bf16.mxu0 0
    %267 = vmatpush1.bf16.msra.mxu0 %v233
    %268 = vmatprep.subr.bf16.mxu0 0
    %269 = vmatpush1.bf16.msra.mxu0 %v234
    %270 = vmatprep.subr.bf16.mxu0 0
    %271 = vmatpush1.bf16.msra.mxu0 %v235
    %272 = vmatprep.subr.bf16.mxu0 0
    %273 = vmatpush1.bf16.msra.mxu0 %v236
    %274 = vmatprep.subr.bf16.mxu0 0
    %275 = vmatpush1.bf16.msra.mxu0 %v237
    %276 = vmatprep.subr.bf16.mxu0 0
    %277 = vmatpush1.bf16.msra.mxu0 %v238
    %278 = vmatprep.subr.bf16.mxu0 0
    %279 = vmatpush1.bf16.msra.mxu0 %v239
    %280 = vmatprep.subr.bf16.mxu0 0
    %281 = vmatpush1.bf16.msra.mxu0 %v240
    %282 = vmatprep.subr.bf16.mxu0 0
    %283 = vmatpush1.bf16.msra.mxu0 %v241
    %284 = vmatprep.subr.bf16.mxu0 0
    %285 = vmatpush1.bf16.msra.mxu0 %v242
    %286 = vmatprep.subr.bf16.mxu0 0
    %287 = vmatpush1.bf16.msra.mxu0 %v243
    %288 = vmatprep.subr.bf16.mxu0 0
    %289 = vmatpush1.bf16.msra.mxu0 %v244
    %290 = vmatprep.subr.bf16.mxu0 0
    %291 = vmatpush1.bf16.msra.mxu0 %v245
    %292 = vmatprep.subr.bf16.mxu0 0
    %293 = vmatpush1.bf16.msra.mxu0 %v246
    %294 = vmatprep.subr.bf16.mxu0 0
    %295 = vmatpush1.bf16.msra.mxu0 %v247
    %296 = vmatprep.mubr.bf16.mxu0 %v128
    %297 = vmatmul.mubr.bf16.gmra.mrb[0].mxu0 %v127
    %v298 = vpop.f32.mrb[0].mxu0
    %v299 = vadd.f32 %v166, %v298
    %v300 = vpop.f32.mrb[0].mxu0
    %v301 = vpop.f32.mrb[0].mxu0
    %v302 = vpop.f32.mrb[0].mxu0
    %303 = vdwg.mxu0
    %v304 = vmax.f32 %v299, 0.0
    %v305 = vld [vmem:[%s5] sm:$0xff]
    %v306 = vld [vmem:[%s5 + $0x8] sm:$0xff]
    %v307 = vld [vmem:[%s5 + $0x10] sm:$0xff]
    %v308 = vld [vmem:[%s5 + $0x18] sm:$0xff]
    %v309 = vld [vmem:[%s5 + $0x20] sm:$0xff]
    %v310 = vld [vmem:[%s5 + $0x28] sm:$0xff]
    %v311 = vld [vmem:[%s5 + $0x30] sm:$0xff]
    %v312 = vld [vmem:[%s5 + $0x38] sm:$0xff]
    %v313 = vld [vmem:[%s5 + $0x40] sm:$0xff]
    %v314 = vld [vmem:[%s5 + $0x48] sm:$0xff]
    %v315 = vld [vmem:[%s5 + $0x50] sm:$0xff]
    %v316 = vld [vmem:[%s5 + $0x58] sm:$0xff]
    %v317 = vld [vmem:[%s5 + $0x60] sm:$0xff]
    %v318 = vld [vmem:[%s5 + $0x68] sm:$0xff]
    %v319 = vld [vmem:[%s5 + $0x70] sm:$0xff]
    %v320 = vld [vmem:[%s5 + $0x78] sm:$0xff]
    %v321 = vld [vmem:[%s6] sm:$0x1]
    %v323 = vlaneseq
    %v324 = vshrl.u32 %v323, 7
    %v325 = vsub.s32 0, %v324
    %v326 = vrot.slane %v321, %v325
    %328 = vmatprep.subr.mxu0 0.0
    %329 = vmatpush1.msra.mxu0 %v305
    %330 = vmatprep.subr.mxu0 0.0
    %331 = vmatpush1.msra.mxu0 %v306
    %332 = vmatprep.subr.mxu0 0.0
    %333 = vmatpush1.msra.mxu0 %v307
    %334 = vmatprep.subr.mxu0 0.0
    %335 = vmatpush1.msra.mxu0 %v308
    %336 = vmatprep.subr.mxu0 0.0
    %337 = vmatpush1.msra.mxu0 %v309
    %338 = vmatprep.subr.mxu0 0.0
    %339 = vmatpush1.msra.mxu0 %v310
    %340 = vmatprep.subr.mxu0 0.0
    %341 = vmatpush1.msra.mxu0 %v311
    %342 = vmatprep.subr.mxu0 0.0
    %343 = vmatpush1.msra.mxu0 %v312
    %344 = vmatprep.subr.mxu0 0.0
    %345 = vmatpush1.msra.mxu0 %v313
    %346 = vmatprep.subr.mxu0 0.0
    %347 = vmatpush1.msra.mxu0 %v314
    %348 = vmatprep.subr.mxu0 0.0
    %349 = vmatpush1.msra.mxu0 %v315
    %350 = vmatprep.subr.mxu0 0.0
    %351 = vmatpush1.msra.mxu0 %v316
    %352 = vmatprep.subr.mxu0 0.0
    %353 = vmatpush1.msra.mxu0 %v317
    %354 = vmatprep.subr.mxu0 0.0
    %355 = vmatpush1.msra.mxu0 %v318
    %356 = vmatprep.subr.mxu0 0.0
    %357 = vmatpush1.msra.mxu0 %v319
    %358 = vmatprep.subr.mxu0 0.0
    %359 = vmatpush1.msra.mxu0 %v320
    %360 = vmatprep.subr.mxu0 0.0
    %361 = vmatpush1.msra.mxu0 0.0
    %362 = vmatprep.subr.mxu0 0.0
    %363 = vmatpush1.msra.mxu0 0.0
    %364 = vmatprep.subr.mxu0 0.0
    %365 = vmatpush1.msra.mxu0 0.0
    %366 = vmatprep.subr.mxu0 0.0
    %367 = vmatpush1.msra.mxu0 0.0
    %368 = vmatprep.subr.mxu0 0.0
    %369 = vmatpush1.msra.mxu0 0.0
    %370 = vmatprep.subr.mxu0 0.0
    %371 = vmatpush1.msra.mxu0 0.0
    %372 = vmatprep.subr.mxu0 0.0
    %373 = vmatpush1.msra.mxu0 0.0
    %374 = vmatprep.subr.mxu0 0.0
    %375 = vmatpush1.msra.mxu0 0.0
    %376 = vmatprep.subr.mxu0 0.0
    %377 = vmatpush1.msra.mxu0 0.0
    %378 = vmatprep.subr.mxu0 0.0
    %379 = vmatpush1.msra.mxu0 0.0
    %380 = vmatprep.subr.mxu0 0.0
    %381 = vmatpush1.msra.mxu0 0.0
    %382 = vmatprep.subr.mxu0 0.0
    %383 = vmatpush1.msra.mxu0 0.0
    %384 = vmatprep.subr.mxu0 0.0
    %385 = vmatpush1.msra.mxu0 0.0
    %386 = vmatprep.subr.mxu0 0.0
    %387 = vmatpush1.msra.mxu0 0.0
    %388 = vmatprep.subr.mxu0 0.0
    %389 = vmatpush1.msra.mxu0 0.0
    %390 = vmatprep.subr.mxu0 0.0
    %391 = vmatpush1.msra.mxu0 0.0
    %392 = vmatprep.mubr.f32.mxu0 0.0
    %393 = vmatmul.mubr.f32.gmra.mrb[0].mxu0 %v304
    %v394 = vpop.f32.mrb[0].mxu0
    %v395 = vadd.f32 %v326, %v394
    %v396 = vpop.f32.mrb[0].mxu0
    %397 = vdwg.mxu0
    %v398 = vtanh.pop %v395
    %vm399 = vcmask 15360
    %400 = vst.msk [vmem:[%s7] sm:$0xff] %vm399, %v398
    // Predicated region
    $region34: #{actor_forward.1} parent=1 // pred_check
      _
    $region35: #{actor_forward.1} parent=1 // pred_check_branch
      %402 = sbr.rel (0) target = $region37
    $region36: #{actor_forward.1} parent=1 // pred_region
      _
    $region37: #{actor_forward.1} parent=1 // pred_fallthru
      _
    // Predicated region
    $region38: #{actor_forward.1} parent=1 // pred_check
      _
    $region39: #{actor_forward.1} parent=1 // pred_check_branch
      %404 = sbr.rel (0) target = $region41
    $region40: #{actor_forward.1} parent=1 // pred_region
      _
    $region41: #{actor_forward.1} parent=1 // pred_fallthru
      _
    %405 = vsyncpa [#allocation3], 1

</llo_original>
